<compile_context>
chip_gen: v6e
topology: v6e:2x2x1
jax: 0.10.0
libtpu: 0.0.40
codegen_flags: <defaults>
</compile_context>

<pallas_src>
import jax
import jax.numpy as jnp
from jax.experimental import pallas as pl
from jax.experimental.pallas import tpu as pltpu


LANE = 128
SUBLANE = 8
MAX_ROW_TILE = 2048  # 2048x128 f32 block = 1 MiB per stream; amortizes per-step overhead


def _mape_kernel(pred_ref, target_ref, out_ref):
    # Elementwise hot path: |(target - pred) / target| * 100
    t = target_ref[...]
    p = pred_ref[...]
    out_ref[...] = jnp.abs((t - p) / t) * 100.0


def mape(pred, target):
    assert pred.shape == target.shape
    orig_shape = pred.shape
    dtype = jnp.result_type(pred.dtype, target.dtype)

    pred_f = pred.astype(dtype).reshape(-1)
    target_f = target.astype(dtype).reshape(-1)
    n = pred_f.shape[0]

    # Pad only to a multiple of 8*128 so the flattened slab has lane width 128 and a
    # sublane-aligned row count. For the common case (numel % 1024 == 0) this is a no-op:
    # no concatenate on the inputs and no slice-copy on the output.
    chunk = SUBLANE * LANE  # 1024
    pad = (-n) % chunk
    if pad:
        pred_f = jnp.pad(pred_f, (0, pad))
        # pad target with ones so the (discarded) tail never divides by zero
        target_f = jnp.pad(target_f, (0, pad), constant_values=1)

    rows = (n + pad) // LANE
    row_tile = min(MAX_ROW_TILE, rows)  # rows is a multiple of 8, so row_tile is too
    grid = (pl.cdiv(rows, row_tile),)
    spec = pl.BlockSpec((row_tile, LANE), lambda i: (i, 0))

    out2 = pl.pallas_call(
        _mape_kernel,
        out_shape=jax.ShapeDtypeStruct((rows, LANE), dtype),
        grid_spec=pltpu.PrefetchScalarGridSpec(
            num_scalar_prefetch=0,
            grid=grid,
            in_specs=[spec, spec],
            out_specs=spec,
        ),
        compiler_params=pltpu.CompilerParams(
            dimension_semantics=("parallel",),
        ),
    )(pred_f.reshape(rows, LANE), target_f.reshape(rows, LANE))

    out = out2.reshape(-1)
    if pad:
        out = out[:n]
    return out.reshape(orig_shape)


if __name__ == "__main__":
    key = jax.random.PRNGKey(0)
    k_pred, k_target, k_pred2, k_target2 = jax.random.split(key, 4)

    # Primary small NCHW-like input (numel = 2048, multiple of 1024 -> zero-copy path).
    shape = (2, 4, 16, 16)
    pred = jax.random.normal(k_pred, shape, dtype=jnp.float32)
    # keep target away from zero (MAPE divides by target; reference module has no epsilon)
    target = jax.random.normal(k_target, shape, dtype=jnp.float32) + 3.0

    loss = mape(pred, target)
    jax.block_until_ready(loss)
    ref = jnp.abs((target - pred) / target) * 100.0
    assert loss.shape == shape
    assert jnp.allclose(loss, ref, rtol=1e-6, atol=1e-6)

    # Ragged shape to exercise the minimal-padding / edge-block path.
    shape2 = (3, 5, 7)
    pred2 = jax.random.normal(k_pred2, shape2, dtype=jnp.float32)
    target2 = jax.random.normal(k_target2, shape2, dtype=jnp.float32) + 3.0
    loss2 = mape(pred2, target2)
    jax.block_until_ready(loss2)
    ref2 = jnp.abs((target2 - pred2) / target2) * 100.0
    assert loss2.shape == shape2
    assert jnp.allclose(loss2, ref2, rtol=1e-6, atol=1e-6)

    print("KERNEL_OK")
</pallas_src>

<mosaic_0001>
module attributes {stable_mosaic.version = 11 : i64} {
  func.func @_mape_kernel(%arg0: i32, %arg1: memref<16x128xf32, #tpu.memory_space<vmem>>, %arg2: memref<16x128xf32, #tpu.memory_space<vmem>>, %arg3: memref<16x128xf32, #tpu.memory_space<vmem>>) attributes {dimension_semantics = [#tpu.dimension_semantics<parallel>], iteration_bounds = array<i64: 1>, scalar_prefetch = 0 : i64, scratch_operands = 0 : i64, tpu.core_type = #tpu.core_type<tc>, window_params = [{transform_indices = @transform_0, window_bounds = array<i64: 16, 128>}, {transform_indices = @transform_1, window_bounds = array<i64: 16, 128>}, {transform_indices = @transform_2, window_bounds = array<i64: 16, 128>}]} {
    %c0 = arith.constant 0 : index
    %c0_0 = arith.constant 0 : index
    %0 = vector.load %arg2[%c0, %c0_0] : memref<16x128xf32, #tpu.memory_space<vmem>>, vector<16x128xf32>
    %c0_1 = arith.constant 0 : index
    %c0_2 = arith.constant 0 : index
    %1 = vector.load %arg1[%c0_1, %c0_2] : memref<16x128xf32, #tpu.memory_space<vmem>>, vector<16x128xf32>
    %2 = arith.subf %0, %1 : vector<16x128xf32>
    %3 = arith.divf %2, %0 : vector<16x128xf32>
    %4 = math.absf %3 : vector<16x128xf32>
    %cst = arith.constant 1.000000e+02 : f32
    %5 = vector.broadcast %cst : f32 to vector<16x128xf32>
    %6 = arith.mulf %4, %5 : vector<16x128xf32>
    %c0_3 = arith.constant 0 : index
    %c0_4 = arith.constant 0 : index
    %7 = vector.load %arg3[%c0_3, %c0_4] : memref<16x128xf32, #tpu.memory_space<vmem>>, vector<16x128xf32>
    tpu.vector_store %arg3[%c0_3, %c0_4], %6 {strides = array<i32>} : memref<16x128xf32, #tpu.memory_space<vmem>>, vector<16x128xf32>,
    return
  }
  func.func @transform_0(%arg0: i32) -> (i32, i32) {
    %c0_i32 = arith.constant 0 : i32
    %c0_i32_0 = arith.constant 0 : i32
    return %arg0, %c0_i32 : i32, i32
  }
  func.func @transform_1(%arg0: i32) -> (i32, i32) {
    %c0_i32 = arith.constant 0 : i32
    %c0_i32_0 = arith.constant 0 : i32
    return %arg0, %c0_i32 : i32, i32
  }
  func.func @transform_2(%arg0: i32) -> (i32, i32) {
    %c0_i32 = arith.constant 0 : i32
    %c0_i32_0 = arith.constant 0 : i32
    return %arg0, %c0_i32 : i32, i32
  }
}

</mosaic_0001>

<llo_original>
// kernel: tpu_custom_call.1
$region0: #{tpu_custom_call.1}
  #allocation0 [shape = 'u32[]', space=smem, size = 0x4, offset = 0x4, fixed_abs, tag = 'smem constant byte address 0x4 - core index']
  #allocation1 [shape = 'u32[144,128]{1,0:T(1,128)}', space=vmem, size = 0x12000, scoped, tag = 'internal scratch']
  %s0 = inlined_call_operand.hbm [shape: f32[16,128], index: 0, kind: input, shape index: {}]
  %s1 = inlined_call_operand.hbm [shape: f32[16,128], index: 1, kind: input, shape index: {}]
  %s2 = inlined_call_operand.hbm [shape: f32[16,128], index: 2, kind: output, shape index: {}]
  %s3 = sld [smem:[#allocation0]]
  $region26: #{tpu_custom_call.1} parent=0
    _
  %s5 = ssub.s32 1, %s3
  %s6 = scalar_select 0, %s5, %s3
  $region1: #{tpu_custom_call.1} parent=0
    #allocation2 [shape = 'u8[8192]{0}', space=vmem, size = 0x2000, scoped, tag = 'input window, operand 0, single buffered']
    #allocation3 [shape = 's32[1]{0}', space=sflag, size = 0x4, scoped, tag = 'scoped memory for tpu_custom_call.1']
    #allocation4 [shape = 's32[1]{0}', space=sflag, size = 0x4, scoped, tag = 'scoped memory for tpu_custom_call.1']
    #allocation5 [shape = 'u8[8192]{0}', space=vmem, size = 0x2000, scoped, tag = 'input window, operand 1, single buffered']
    #allocation6 [shape = 's32[1]{0}', space=sflag, size = 0x4, scoped, tag = 'scoped memory for tpu_custom_call.1']
    #allocation7 [shape = 'u8[8192]{0}', space=vmem, size = 0x2000, scoped, tag = 'output window, operand 0, single buffered']
    %7 = vsyncpa [#allocation3], 0
    %8 = vsyncpa [#allocation6], 0
    %9 = vsyncpa [#allocation4], 0
    // Predicated region
    $region2: #{tpu_custom_call.1} parent=1 // pred_check
      _
    $region3: #{tpu_custom_call.1} parent=1 // pred_check_branch
      %11 = sbr.rel (0) target = $region5
    $region4: #{tpu_custom_call.1} parent=1 // pred_region
      %s13 = ssub.s32 256, 256
      %14 = vsyncadd [#allocation3], %s13
      %s15 = sshll.u32 [#allocation2], 4
      %s16 = int_to_ptr.vmem [resolvable:$true] %s15
      %21 = dma.hbm_to_vmem [thread:$0]  %s0, 256, %s16, [#allocation3], 128, 128, 8
    $region5: #{tpu_custom_call.1} parent=1 // pred_fallthru
      _
    // Predicated region
    $region6: #{tpu_custom_call.1} parent=1 // pred_check
      _
    $region7: #{tpu_custom_call.1} parent=1 // pred_check_branch
      %23 = sbr.rel (0) target = $region9
    $region8: #{tpu_custom_call.1} parent=1 // pred_region
      %s25 = ssub.s32 256, 256
      %26 = vsyncadd [#allocation6], %s25
      %s27 = sshll.u32 [#allocation5], 4
      %s28 = int_to_ptr.vmem [resolvable:$true] %s27
      %33 = dma.hbm_to_vmem [thread:$0]  %s1, 256, %s28, [#allocation6], 128, 128, 8
    $region9: #{tpu_custom_call.1} parent=1 // pred_fallthru
      _
    // Predicated region
    $region10: #{tpu_custom_call.1} parent=1 // pred_check
      _
    $region11: #{tpu_custom_call.1} parent=1 // pred_check_branch
      %35 = sbr.rel (0) target = $region13
    $region12: #{tpu_custom_call.1} parent=1 // pred_region
      %36 = dma.done [#allocation3], 256
    $region13: #{tpu_custom_call.1} parent=1 // pred_fallthru
      _
    // Predicated region
    $region14: #{tpu_custom_call.1} parent=1 // pred_check
      _
    $region15: #{tpu_custom_call.1} parent=1 // pred_check_branch
      %38 = sbr.rel (0) target = $region17
    $region16: #{tpu_custom_call.1} parent=1 // pred_region
      %39 = dma.done [#allocation6], 256
    $region17: #{tpu_custom_call.1} parent=1 // pred_fallthru
      _
    %v40 = vld [vmem:[#allocation5] sm:$0xff]
    %v41 = vld [vmem:[#allocation5 + $0x8] sm:$0xff]
    %v42 = vld [vmem:[#allocation2] sm:$0xff]
    %v43 = vld [vmem:[#allocation2 + $0x8] sm:$0xff]
    %v44 = vsub.f32 %v40, %v42
    %v45 = vsub.f32 %v41, %v43
    %v46 = vrcp.pop %v40
    %v47 = vmul.f32 %v44, %v46
    %v48 = vrcp.pop %v41
    %v49 = vmul.f32 %v45, %v48
    %v50 = vand.u32 2147483647, %v47
    %v51 = vand.u32 2147483647, %v49
    %v52 = vmul.f32 %v50, 100.0
    %v53 = vmul.f32 %v51, 100.0
    %54 = vst [vmem:[#allocation7] sm:$0xff] %v52
    %55 = vst [vmem:[#allocation7 + $0x8] sm:$0xff] %v53
    // Predicated region
    $region18: #{tpu_custom_call.1} parent=1 // pred_check
      _
    $region19: #{tpu_custom_call.1} parent=1 // pred_check_branch
      %57 = sbr.rel (0) target = $region21
    $region20: #{tpu_custom_call.1} parent=1 // pred_region
      %s59 = ssub.s32 256, 256
      %60 = vsyncadd [#allocation4], %s59
      %s61 = sshll.u32 [#allocation7], 4
      %s62 = int_to_ptr.vmem [resolvable:$true] %s61
      %67 = dma.vmem_to_hbm [thread:$0]  %s62, 256, %s2, [#allocation4], 128, 128, 8
    $region21: #{tpu_custom_call.1} parent=1 // pred_fallthru
      _
    // Predicated region
    $region22: #{tpu_custom_call.1} parent=1 // pred_check
      _
    $region23: #{tpu_custom_call.1} parent=1 // pred_check_branch
      %69 = sbr.rel (0) target = $region25
    $region24: #{tpu_custom_call.1} parent=1 // pred_region
      %70 = dma.done [#allocation4], 256
    $region25: #{tpu_custom_call.1} parent=1 // pred_fallthru
      _
    %71 = vsyncpa [#allocation3], 1
    %72 = vsyncpa [#allocation6], 1
    %73 = vsyncpa [#allocation4], 1

</llo_original>
